<compile_context>
chip_gen: v6e
topology: v6e:2x2x1
jax: 0.10.0
libtpu: 0.0.40
codegen_flags: <defaults>
</compile_context>

<pallas_src>
import jax
import jax.numpy as jnp
from jax.experimental import pallas as pl
from jax.experimental.pallas import tpu as pltpu

LEAKY_SLOPE = 0.01   # torch.nn.LeakyReLU default negative_slope
LANE = 128           # TPU lane width
SUBLANE = 8          # f32 sublane count


def _leaky_relu(x):
    return jnp.where(x > 0, x, LEAKY_SLOPE * x)


def mlp_kernel(x_ref, w1_ref, b1_ref, w2_ref, b2_ref, w3_ref, b3_ref, o_ref):
    # x tile: (tb, in_feats) f32, feature-unpadded.  Cast to bf16 in-kernel
    # (rides free VPU slots under the MXU/DMA); f32 accumulation throughout.
    x = x_ref[...].astype(jnp.bfloat16)

    h = jnp.dot(x, w1_ref[...], preferred_element_type=jnp.float32)
    h = _leaky_relu(h + b1_ref[...])

    h = jnp.dot(h.astype(jnp.bfloat16), w2_ref[...],
                preferred_element_type=jnp.float32)
    h = _leaky_relu(h + b2_ref[...])

    h = jnp.dot(h.astype(jnp.bfloat16), w3_ref[...],
                preferred_element_type=jnp.float32)
    h = _leaky_relu(h + b3_ref[...])

    o_ref[...] = h.astype(o_ref.dtype)


def _round_up(n, m):
    return ((n + m - 1) // m) * m


def _pad2d(a, rows, cols):
    return jnp.pad(a, ((0, rows - a.shape[0]), (0, cols - a.shape[1])))


def mlperceptron_forward(x, params, *, block_rows=1024):
    """x: (B, in_feats) float32.

    params: weights stored as (in_dim, out_dim) == torch weight.T, biases 1-D.
    """
    w1, b1 = params["w1"], params["b1"]
    w2, b2 = params["w2"], params["b2"]
    w3, b3 = params["w3"], params["b3"]

    B, in_feats = x.shape
    h1, h2, num_classes = w1.shape[1], w2.shape[1], w3.shape[1]

    # Only hidden dims get lane-padded (they never touch HBM as activations);
    # zero padding of contraction dims + biases keeps the result exact.
    # in_feats and num_classes stay unpadded -> no wasted HBM bytes.
    h1_p = _round_up(h1, LANE)
    h2_p = _round_up(h2, LANE)

    # Batch tile: sublane-aligned, large to amortize ~0.35us/step overhead,
    # and split so the grid has >=2 steps (megacore on v7x) when B allows.
    tb = min(block_rows, _round_up(B, SUBLANE))
    if B > 2 * SUBLANE and pl.cdiv(B, tb) < 2:
        tb = _round_up(pl.cdiv(B, 2), SUBLANE)
    grid = (pl.cdiv(B, tb),)   # ragged last block is masked on writeback

    # Weights/biases: tiny, cast/pad once; VMEM-resident via constant index_map.
    w1_p = _pad2d(w1, in_feats, h1_p).astype(jnp.bfloat16)
    w2_p = _pad2d(w2, h1_p, h2_p).astype(jnp.bfloat16)
    w3_p = _pad2d(w3, h2_p, num_classes).astype(jnp.bfloat16)
    b1_p = _pad2d(b1.reshape(1, -1), 1, h1_p).astype(jnp.float32)
    b2_p = _pad2d(b2.reshape(1, -1), 1, h2_p).astype(jnp.float32)
    b3_p = b3.reshape(1, -1).astype(jnp.float32)

    resident = lambda i: (0, 0)  # same block every step -> stays in VMEM

    out = pl.pallas_call(
        mlp_kernel,
        out_shape=jax.ShapeDtypeStruct((B, num_classes), jnp.float32),
        grid=grid,
        in_specs=[
            pl.BlockSpec((tb, in_feats), lambda i: (i, 0)),   # x streams, f32
            pl.BlockSpec((in_feats, h1_p), resident),
            pl.BlockSpec((1, h1_p), resident),
            pl.BlockSpec((h1_p, h2_p), resident),
            pl.BlockSpec((1, h2_p), resident),
            pl.BlockSpec((h2_p, num_classes), resident),
            pl.BlockSpec((1, num_classes), resident),
        ],
        out_specs=pl.BlockSpec((tb, num_classes), lambda i: (i, 0)),
        compiler_params=pltpu.CompilerParams(
            dimension_semantics=("parallel",),   # shard batch across TCs (v7x)
            vmem_limit_bytes=32 * 1024 * 1024,   # explicit (v5e scoped default is 16 MiB)
        ),
    )(x.astype(jnp.float32), w1_p, b1_p, w2_p, b2_p, w3_p, b3_p)

    return out


def init_params(key, in_feats, h_feats, num_classes):
    """Deterministic synthetic init (PyTorch-Linear-like uniform ranges)."""
    ks = jax.random.split(key, 6)

    def uniform(k, shape, fan_in):
        bound = 1.0 / jnp.sqrt(fan_in)
        return jax.random.uniform(k, shape, jnp.float32, -bound, bound)

    # weights stored as (in_dim, out_dim) == PyTorch weight.T; biases 1-D
    return {
        "w1": uniform(ks[0], (in_feats, h_feats), in_feats),
        "b1": uniform(ks[1], (h_feats,), in_feats),
        "w2": uniform(ks[2], (h_feats, 20), h_feats),
        "b2": uniform(ks[3], (20,), h_feats),
        "w3": uniform(ks[4], (20, num_classes), 20),
        "b3": uniform(ks[5], (num_classes,), 20),
    }


def reference_forward(x, params):
    """Pure-f32 reference matching the PyTorch module semantics."""
    h = x @ params["w1"] + params["b1"]
    h = jnp.where(h > 0, h, LEAKY_SLOPE * h)
    h = h @ params["w2"] + params["b2"]
    h = jnp.where(h > 0, h, LEAKY_SLOPE * h)
    h = h @ params["w3"] + params["b3"]
    h = jnp.where(h > 0, h, LEAKY_SLOPE * h)
    return h


if __name__ == "__main__":
    in_feats, h_feats, num_classes = 32, 16, 10
    batch = 8

    key = jax.random.PRNGKey(0)
    k_x, k_p = jax.random.split(key)
    x = jax.random.normal(k_x, (batch, in_feats), jnp.float32)
    params = init_params(k_p, in_feats, h_feats, num_classes)

    out = mlperceptron_forward(x, params)
    out = jax.block_until_ready(out)

    ref = reference_forward(x, params)
    assert out.shape == (batch, num_classes)
    # MXU inputs are bf16 (f32 accumulate), so allow bf16-level quantization
    # error vs the pure-f32 reference.
    assert jnp.allclose(out, ref, atol=5e-2, rtol=5e-2), "mismatch vs reference"

    print("KERNEL_OK")
</pallas_src>

<mosaic_0001>
module attributes {stable_mosaic.version = 11 : i64} {
  func.func @mlp_kernel(%arg0: i32, %arg1: memref<8x32xf32, #tpu.memory_space<vmem>>, %arg2: memref<32x128xbf16, #tpu.memory_space<vmem>>, %arg3: memref<1x128xf32, #tpu.memory_space<vmem>>, %arg4: memref<128x128xbf16, #tpu.memory_space<vmem>>, %arg5: memref<1x128xf32, #tpu.memory_space<vmem>>, %arg6: memref<128x10xbf16, #tpu.memory_space<vmem>>, %arg7: memref<1x10xf32, #tpu.memory_space<vmem>>, %arg8: memref<8x10xf32, #tpu.memory_space<vmem>>) attributes {dimension_semantics = [#tpu.dimension_semantics<parallel>], iteration_bounds = array<i64: 1>, scalar_prefetch = 0 : i64, scratch_operands = 0 : i64, tpu.core_type = #tpu.core_type<tc>, window_params = [{transform_indices = @transform_0, window_bounds = array<i64: 8, 32>}, {pipeline_mode = #tpu.pipeline_mode<synchronous>, transform_indices = @transform_1, window_bounds = array<i64: 32, 128>}, {pipeline_mode = #tpu.pipeline_mode<synchronous>, transform_indices = @transform_2, window_bounds = array<i64: 1, 128>}, {pipeline_mode = #tpu.pipeline_mode<synchronous>, transform_indices = @transform_3, window_bounds = array<i64: 128, 128>}, {pipeline_mode = #tpu.pipeline_mode<synchronous>, transform_indices = @transform_4, window_bounds = array<i64: 1, 128>}, {pipeline_mode = #tpu.pipeline_mode<synchronous>, transform_indices = @transform_5, window_bounds = array<i64: 128, 10>}, {pipeline_mode = #tpu.pipeline_mode<synchronous>, transform_indices = @transform_6, window_bounds = array<i64: 1, 10>}, {transform_indices = @transform_7, window_bounds = array<i64: 8, 10>}]} {
    %c0 = arith.constant 0 : index
    %c0_0 = arith.constant 0 : index
    %0 = vector.load %arg1[%c0, %c0_0] : memref<8x32xf32, #tpu.memory_space<vmem>>, vector<8x32xf32>
    %1 = arith.truncf %0 : vector<8x32xf32> to vector<8x32xbf16>
    %c0_1 = arith.constant 0 : index
    %c0_2 = arith.constant 0 : index
    %2 = vector.load %arg2[%c0_1, %c0_2] : memref<32x128xbf16, #tpu.memory_space<vmem>>, vector<32x128xbf16>
    %cst = arith.constant dense<0.000000e+00> : vector<8x128xf32>
    %3 = tpu.matmul %1, %2, %cst {dimension_numbers = #tpu.dot_dimension_numbers<[1], [0], [0], [1], [0, 0, 1, 1], [], []>} : vector<8x32xbf16>, vector<32x128xbf16>, vector<8x128xf32> -> vector<8x128xf32>
    %c0_3 = arith.constant 0 : index
    %c0_4 = arith.constant 0 : index
    %4 = vector.load %arg3[%c0_3, %c0_4] : memref<1x128xf32, #tpu.memory_space<vmem>>, vector<1x128xf32>
    %5 = vector.broadcast %4 : vector<1x128xf32> to vector<8x128xf32>
    %6 = arith.addf %3, %5 : vector<8x128xf32>
    %cst_5 = arith.constant 0.000000e+00 : f32
    %7 = vector.broadcast %cst_5 : f32 to vector<8x128xf32>
    %8 = arith.cmpf ogt, %6, %7 : vector<8x128xf32>
    %cst_6 = arith.constant 0.00999999977 : f32
    %9 = vector.broadcast %cst_6 : f32 to vector<8x128xf32>
    %10 = arith.mulf %9, %6 : vector<8x128xf32>
    %11 = arith.select %8, %6, %10 : vector<8x128xi1>, vector<8x128xf32>
    %12 = arith.truncf %11 : vector<8x128xf32> to vector<8x128xbf16>
    %c0_7 = arith.constant 0 : index
    %c0_8 = arith.constant 0 : index
    %13 = vector.load %arg4[%c0_7, %c0_8] : memref<128x128xbf16, #tpu.memory_space<vmem>>, vector<128x128xbf16>
    %cst_9 = arith.constant dense<0.000000e+00> : vector<8x128xf32>
    %14 = tpu.matmul %12, %13, %cst_9 {dimension_numbers = #tpu.dot_dimension_numbers<[1], [0], [0], [1], [0, 0, 1, 1], [], []>} : vector<8x128xbf16>, vector<128x128xbf16>, vector<8x128xf32> -> vector<8x128xf32>
    %c0_10 = arith.constant 0 : index
    %c0_11 = arith.constant 0 : index
    %15 = vector.load %arg5[%c0_10, %c0_11] : memref<1x128xf32, #tpu.memory_space<vmem>>, vector<1x128xf32>
    %16 = vector.broadcast %15 : vector<1x128xf32> to vector<8x128xf32>
    %17 = arith.addf %14, %16 : vector<8x128xf32>
    %cst_12 = arith.constant 0.000000e+00 : f32
    %18 = vector.broadcast %cst_12 : f32 to vector<8x128xf32>
    %19 = arith.cmpf ogt, %17, %18 : vector<8x128xf32>
    %cst_13 = arith.constant 0.00999999977 : f32
    %20 = vector.broadcast %cst_13 : f32 to vector<8x128xf32>
    %21 = arith.mulf %20, %17 : vector<8x128xf32>
    %22 = arith.select %19, %17, %21 : vector<8x128xi1>, vector<8x128xf32>
    %23 = arith.truncf %22 : vector<8x128xf32> to vector<8x128xbf16>
    %c0_14 = arith.constant 0 : index
    %c0_15 = arith.constant 0 : index
    %24 = vector.load %arg6[%c0_14, %c0_15] : memref<128x10xbf16, #tpu.memory_space<vmem>>, vector<128x10xbf16>
    %cst_16 = arith.constant dense<0.000000e+00> : vector<8x10xf32>
    %25 = tpu.matmul %23, %24, %cst_16 {dimension_numbers = #tpu.dot_dimension_numbers<[1], [0], [0], [1], [0, 0, 1, 1], [], []>} : vector<8x128xbf16>, vector<128x10xbf16>, vector<8x10xf32> -> vector<8x10xf32>
    %c0_17 = arith.constant 0 : index
    %c0_18 = arith.constant 0 : index
    %26 = vector.load %arg7[%c0_17, %c0_18] : memref<1x10xf32, #tpu.memory_space<vmem>>, vector<1x10xf32>
    %27 = vector.broadcast %26 : vector<1x10xf32> to vector<8x10xf32>
    %28 = arith.addf %25, %27 : vector<8x10xf32>
    %cst_19 = arith.constant 0.000000e+00 : f32
    %29 = vector.broadcast %cst_19 : f32 to vector<8x10xf32>
    %30 = arith.cmpf ogt, %28, %29 : vector<8x10xf32>
    %cst_20 = arith.constant 0.00999999977 : f32
    %31 = vector.broadcast %cst_20 : f32 to vector<8x10xf32>
    %32 = arith.mulf %31, %28 : vector<8x10xf32>
    %33 = arith.select %30, %28, %32 : vector<8x10xi1>, vector<8x10xf32>
    %c0_21 = arith.constant 0 : index
    %c0_22 = arith.constant 0 : index
    %34 = vector.load %arg8[%c0_21, %c0_22] : memref<8x10xf32, #tpu.memory_space<vmem>>, vector<8x10xf32>
    tpu.vector_store %arg8[%c0_21, %c0_22], %33 {strides = array<i32>} : memref<8x10xf32, #tpu.memory_space<vmem>>, vector<8x10xf32>,
    return
  }
  func.func @transform_0(%arg0: i32) -> (i32, i32) {
    %c0_i32 = arith.constant 0 : i32
    %c0_i32_0 = arith.constant 0 : i32
    return %arg0, %c0_i32 : i32, i32
  }
  func.func @transform_1(%arg0: i32) -> (i32, i32) {
    %c0_i32 = arith.constant 0 : i32
    %c0_i32_0 = arith.constant 0 : i32
    %c0_i32_1 = arith.constant 0 : i32
    return %c0_i32, %c0_i32_0 : i32, i32
  }
  func.func @transform_2(%arg0: i32) -> (i32, i32) {
    %c0_i32 = arith.constant 0 : i32
    %c0_i32_0 = arith.constant 0 : i32
    %c0_i32_1 = arith.constant 0 : i32
    return %c0_i32, %c0_i32_0 : i32, i32
  }
  func.func @transform_3(%arg0: i32) -> (i32, i32) {
    %c0_i32 = arith.constant 0 : i32
    %c0_i32_0 = arith.constant 0 : i32
    %c0_i32_1 = arith.constant 0 : i32
    return %c0_i32, %c0_i32_0 : i32, i32
  }
  func.func @transform_4(%arg0: i32) -> (i32, i32) {
    %c0_i32 = arith.constant 0 : i32
    %c0_i32_0 = arith.constant 0 : i32
    %c0_i32_1 = arith.constant 0 : i32
    return %c0_i32, %c0_i32_0 : i32, i32
  }
  func.func @transform_5(%arg0: i32) -> (i32, i32) {
    %c0_i32 = arith.constant 0 : i32
    %c0_i32_0 = arith.constant 0 : i32
    %c0_i32_1 = arith.constant 0 : i32
    return %c0_i32, %c0_i32_0 : i32, i32
  }
  func.func @transform_6(%arg0: i32) -> (i32, i32) {
    %c0_i32 = arith.constant 0 : i32
    %c0_i32_0 = arith.constant 0 : i32
    %c0_i32_1 = arith.constant 0 : i32
    return %c0_i32, %c0_i32_0 : i32, i32
  }
  func.func @transform_7(%arg0: i32) -> (i32, i32) {
    %c0_i32 = arith.constant 0 : i32
    %c0_i32_0 = arith.constant 0 : i32
    return %arg0, %c0_i32 : i32, i32
  }
}

</mosaic_0001>

<llo_original>
// kernel: tpu_custom_call.1
$region0: #{tpu_custom_call.1}
  #allocation0 [shape = 'u32[]', space=smem, size = 0x4, offset = 0x4, fixed_abs, tag = 'smem constant byte address 0x4 - core index']
  #allocation1 [shape = 'u32[144,128]{1,0:T(1,128)}', space=vmem, size = 0x12000, scoped, tag = 'internal scratch']
  %s0 = inlined_call_operand.vmem [shape: f32[8,32], index: 0, kind: input, shape index: {}]
  %s1 = inlined_call_operand.hbm [shape: bf16[32,128], index: 1, kind: input, shape index: {}]
  %s2 = inlined_call_operand.vmem [shape: f32[1,128], index: 2, kind: input, shape index: {}]
  %s3 = inlined_call_operand.vmem [shape: bf16[128,128], index: 3, kind: input, shape index: {}]
  %s4 = inlined_call_operand.hbm [shape: f32[1,128], index: 4, kind: input, shape index: {}]
  %s5 = inlined_call_operand.vmem [shape: bf16[128,10], index: 5, kind: input, shape index: {}]
  %s6 = inlined_call_operand.vmem [shape: f32[1,10], index: 6, kind: input, shape index: {}]
  %s7 = inlined_call_operand.hbm [shape: f32[8,10], index: 7, kind: output, shape index: {}]
  %s8 = sld [smem:[#allocation0]]
  $region46: #{tpu_custom_call.1} parent=0
    _
  %s10 = ssub.s32 1, %s8
  %s11 = scalar_select 0, %s10, %s8
  $region1: #{tpu_custom_call.1} parent=0
    #allocation2 [shape = 'u8[8192]{0}', space=vmem, size = 0x2000, scoped, tag = 'input window, operand 1, single buffered']
    #allocation3 [shape = 's32[1]{0}', space=sflag, size = 0x4, scoped, tag = 'scoped memory for tpu_custom_call.1']
    #allocation4 [shape = 's32[1]{0}', space=sflag, size = 0x4, scoped, tag = 'scoped memory for tpu_custom_call.1']
    #allocation5 [shape = 'u8[512]{0}', space=vmem, size = 0x400, scoped, tag = 'input window, operand 4, single buffered']
    #allocation6 [shape = 's32[1]{0}', space=sflag, size = 0x4, scoped, tag = 'scoped memory for tpu_custom_call.1']
    #allocation7 [shape = 'u8[4096]{0}', space=vmem, size = 0x1000, scoped, tag = 'output window, operand 0, single buffered']
    %12 = vsyncpa [#allocation3], 0
    %13 = vsyncpa [#allocation6], 0
    %14 = vsyncpa [#allocation4], 0
    // Predicated region
    $region2: #{tpu_custom_call.1} parent=1 // pred_check
      _
    $region3: #{tpu_custom_call.1} parent=1 // pred_check_branch
      %16 = sbr.rel (0) target = $region5
    $region4: #{tpu_custom_call.1} parent=1 // pred_region
      _
    $region5: #{tpu_custom_call.1} parent=1 // pred_fallthru
      _
    // Predicated region
    $region6: #{tpu_custom_call.1} parent=1 // pred_check
      _
    $region7: #{tpu_custom_call.1} parent=1 // pred_check_branch
      %18 = sbr.rel (0) target = $region9
    $region8: #{tpu_custom_call.1} parent=1 // pred_region
      %s20 = ssub.s32 256, 256
      %21 = vsyncadd [#allocation3], %s20
      %s22 = sshll.u32 [#allocation2], 4
      %s23 = int_to_ptr.vmem [resolvable:$true] %s22
      %28 = dma.hbm_to_vmem [thread:$0]  %s1, 256, %s23, [#allocation3], 64, 64, 4
    $region9: #{tpu_custom_call.1} parent=1 // pred_fallthru
      _
    // Predicated region
    $region10: #{tpu_custom_call.1} parent=1 // pred_check
      _
    $region11: #{tpu_custom_call.1} parent=1 // pred_check_branch
      %30 = sbr.rel (0) target = $region13
    $region12: #{tpu_custom_call.1} parent=1 // pred_region
      _
    $region13: #{tpu_custom_call.1} parent=1 // pred_fallthru
      _
    // Predicated region
    $region14: #{tpu_custom_call.1} parent=1 // pred_check
      _
    $region15: #{tpu_custom_call.1} parent=1 // pred_check_branch
      %32 = sbr.rel (0) target = $region17
    $region16: #{tpu_custom_call.1} parent=1 // pred_region
      _
    $region17: #{tpu_custom_call.1} parent=1 // pred_fallthru
      _
    // Predicated region
    $region18: #{tpu_custom_call.1} parent=1 // pred_check
      _
    $region19: #{tpu_custom_call.1} parent=1 // pred_check_branch
      %34 = sbr.rel (0) target = $region21
    $region20: #{tpu_custom_call.1} parent=1 // pred_region
      %s36 = ssub.s32 16, 16
      %37 = vsyncadd [#allocation6], %s36
      %s39 = sshll.u32 [#allocation5], 4
      %s40 = int_to_ptr.vmem [resolvable:$true] %s39
      %42 = dma.hbm_to_vmem [thread:$0]  %s4, 16, %s40, [#allocation6]
    $region21: #{tpu_custom_call.1} parent=1 // pred_fallthru
      _
    // Predicated region
    $region22: #{tpu_custom_call.1} parent=1 // pred_check
      _
    $region23: #{tpu_custom_call.1} parent=1 // pred_check_branch
      %44 = sbr.rel (0) target = $region25
    $region24: #{tpu_custom_call.1} parent=1 // pred_region
      _
    $region25: #{tpu_custom_call.1} parent=1 // pred_fallthru
      _
    // Predicated region
    $region26: #{tpu_custom_call.1} parent=1 // pred_check
      _
    $region27: #{tpu_custom_call.1} parent=1 // pred_check_branch
      %46 = sbr.rel (0) target = $region29
    $region28: #{tpu_custom_call.1} parent=1 // pred_region
      _
    $region29: #{tpu_custom_call.1} parent=1 // pred_fallthru
      _
    // Predicated region
    $region30: #{tpu_custom_call.1} parent=1 // pred_check
      _
    $region31: #{tpu_custom_call.1} parent=1 // pred_check_branch
      %48 = sbr.rel (0) target = $region33
    $region32: #{tpu_custom_call.1} parent=1 // pred_region
      %49 = dma.done [#allocation3], 256
    $region33: #{tpu_custom_call.1} parent=1 // pred_fallthru
      _
    // Predicated region
    $region34: #{tpu_custom_call.1} parent=1 // pred_check
      _
    $region35: #{tpu_custom_call.1} parent=1 // pred_check_branch
      %51 = sbr.rel (0) target = $region37
    $region36: #{tpu_custom_call.1} parent=1 // pred_region
      %52 = dma.done [#allocation6], 16
    $region37: #{tpu_custom_call.1} parent=1 // pred_fallthru
      _
    %v54 = vld [vmem:[%s0] sm:$0xff]
    %v55 = vpack.c.bf16 %v54, %v54
    %v56 = vld [vmem:[#allocation2] sm:$0xf]
    %v57 = vld [vmem:[#allocation2 + $0x4] sm:$0xf]
    %v58 = vld [vmem:[#allocation2 + $0x8] sm:$0xf]
    %v59 = vld [vmem:[#allocation2 + $0xc] sm:$0xf]
    %v60 = vld [vmem:[%s2] sm:$0x1]
    %v62 = vlaneseq
    %v63 = vshrl.u32 %v62, 7
    %v64 = vsub.s32 0, %v63
    %v65 = vrot.slane %v60, %v64
    %v71 = vunpack.c.l.b16 %v56
    %v72 = vunpack.c.l.b16 %v57
    %v73 = vunpack.c.l.b16 %v58
    %v74 = vunpack.c.l.b16 %v59
    %v75 = vpack.c.b16 %v72, %v71
    %v76 = vpack.c.b16 %v74, %v73
    %vm79 = vcmask 261120
    %v81 = vsel %vm79, %v55, 0
    %83 = vmatprep.subr.bf16.mxu0 0
    %84 = vmatpush1.bf16.msra.mxu0 0
    %85 = vmatprep.subr.bf16.mxu0 0
    %86 = vmatpush1.bf16.msra.mxu0 0
    %87 = vmatprep.subr.bf16.mxu0 0
    %88 = vmatpush1.bf16.msra.mxu0 0
    %89 = vmatprep.subr.bf16.mxu0 0
    %90 = vmatpush1.bf16.msra.mxu0 0
    %91 = vmatprep.subr.bf16.mxu0 0
    %92 = vmatpush1.bf16.msra.mxu0 0
    %93 = vmatprep.subr.bf16.mxu0 0
    %94 = vmatpush1.bf16.msra.mxu0 0
    %95 = vmatprep.subr.bf16.mxu0 0
    %96 = vmatpush1.bf16.msra.mxu0 %v76
    %97 = vmatprep.subr.bf16.mxu0 0
    %98 = vmatpush1.bf16.msra.mxu0 %v75
    %99 = vmatprep.subr.bf16.mxu0 0
    %100 = vmatpush2.bf16.msra.mxu0 0
    %101 = vmatprep.subr.bf16.mxu0 0
    %102 = vmatpush2.bf16.msra.mxu0 0
    %103 = vmatprep.subr.bf16.mxu0 0
    %104 = vmatpush2.bf16.msra.mxu0 0
    %105 = vmatprep.subr.bf16.mxu0 0
    %106 = vmatpush2.bf16.msra.mxu0 0
    %107 = vmatprep.subr.bf16.mxu0 0
    %108 = vmatpush2.bf16.msra.mxu0 0
    %109 = vmatprep.subr.bf16.mxu0 0
    %110 = vmatpush2.bf16.msra.mxu0 0
    %111 = vmatprep.subr.bf16.mxu0 0
    %112 = vmatpush2.bf16.msra.mxu0 0
    %113 = vmatprep.subr.bf16.mxu0 0
    %114 = vmatpush2.bf16.msra.mxu0 0
    %115 = vmatprep.mubr.bf16.mxu0 0
    %116 = vmatmul.mubr.bf16.gmra.mxu0 %v81
    %v117 = vpop.f32.mrf.mxu0
    %v118 = vadd.f32 %v65, %v117
    %v119 = vpop.f32.mrf.mxu0
    %v120 = vpop.f32.mrf.mxu0
    %v121 = vpop.f32.mrf.mxu0
    %122 = vdwg.mxu0
    %vm123 = vcmp.gt.f32.partialorder %v118, 0.0
    %v124 = vmul.f32 %v118, 0.01
    %v125 = vsel %vm123, %v118, %v124
    %v126 = vpack.c.bf16 %v125, %v125
    %v127 = vld [vmem:[%s3] sm:$0xf]
    %v128 = vld [vmem:[%s3 + $0x4] sm:$0xf]
    %v129 = vld [vmem:[%s3 + $0x8] sm:$0xf]
    %v130 = vld [vmem:[%s3 + $0xc] sm:$0xf]
    %v131 = vld [vmem:[%s3 + $0x10] sm:$0xf]
    %v132 = vld [vmem:[%s3 + $0x14] sm:$0xf]
    %v133 = vld [vmem:[%s3 + $0x18] sm:$0xf]
    %v134 = vld [vmem:[%s3 + $0x1c] sm:$0xf]
    %v135 = vld [vmem:[%s3 + $0x20] sm:$0xf]
    %v136 = vld [vmem:[%s3 + $0x24] sm:$0xf]
    %v137 = vld [vmem:[%s3 + $0x28] sm:$0xf]
    %v138 = vld [vmem:[%s3 + $0x2c] sm:$0xf]
    %v139 = vld [vmem:[%s3 + $0x30] sm:$0xf]
    %v140 = vld [vmem:[%s3 + $0x34] sm:$0xf]
    %v141 = vld [vmem:[%s3 + $0x38] sm:$0xf]
    %v142 = vld [vmem:[%s3 + $0x3c] sm:$0xf]
    %v143 = vld [vmem:[#allocation5] sm:$0x1]
    %v145 = vlaneseq
    %v146 = vshrl.u32 %v145, 7
    %v147 = vsub.s32 0, %v146
    %v148 = vrot.slane %v143, %v147
    %v166 = vunpack.c.l.b16 %v127
    %v167 = vunpack.c.l.b16 %v128
    %v168 = vunpack.c.l.b16 %v129
    %v169 = vunpack.c.l.b16 %v130
    %v170 = vunpack.c.l.b16 %v131
    %v171 = vunpack.c.l.b16 %v132
    %v172 = vunpack.c.l.b16 %v133
    %v173 = vunpack.c.l.b16 %v134
    %v174 = vunpack.c.l.b16 %v135
    %v175 = vunpack.c.l.b16 %v136
    %v176 = vunpack.c.l.b16 %v137
    %v177 = vunpack.c.l.b16 %v138
    %v178 = vunpack.c.l.b16 %v139
    %v179 = vunpack.c.l.b16 %v140
    %v180 = vunpack.c.l.b16 %v141
    %v181 = vunpack.c.l.b16 %v142
    %v182 = vpack.c.b16 %v167, %v166
    %v183 = vpack.c.b16 %v169, %v168
    %v184 = vpack.c.b16 %v171, %v170
    %v185 = vpack.c.b16 %v173, %v172
    %v186 = vpack.c.b16 %v175, %v174
    %v187 = vpack.c.b16 %v177, %v176
    %v188 = vpack.c.b16 %v179, %v178
    %v189 = vpack.c.b16 %v181, %v180
    %198 = vmatprep.subr.bf16.mxu0 0
    %199 = vmatpush1.bf16.msra.mxu0 %v189
    %200 = vmatprep.subr.bf16.mxu0 0
    %201 = vmatpush1.bf16.msra.mxu0 %v188
    %202 = vmatprep.subr.bf16.mxu0 0
    %203 = vmatpush1.bf16.msra.mxu0 %v187
    %204 = vmatprep.subr.bf16.mxu0 0
    %205 = vmatpush1.bf16.msra.mxu0 %v186
    %206 = vmatprep.subr.bf16.mxu0 0
    %207 = vmatpush1.bf16.msra.mxu0 %v185
    %208 = vmatprep.subr.bf16.mxu0 0
    %209 = vmatpush1.bf16.msra.mxu0 %v184
    %210 = vmatprep.subr.bf16.mxu0 0
    %211 = vmatpush1.bf16.msra.mxu0 %v183
    %212 = vmatprep.subr.bf16.mxu0 0
    %213 = vmatpush1.bf16.msra.mxu0 %v182
    %214 = vmatprep.subr.bf16.mxu0 0
    %215 = vmatpush2.bf16.msra.mxu0 0
    %216 = vmatprep.subr.bf16.mxu0 0
    %217 = vmatpush2.bf16.msra.mxu0 0
    %218 = vmatprep.subr.bf16.mxu0 0
    %219 = vmatpush2.bf16.msra.mxu0 0
    %220 = vmatprep.subr.bf16.mxu0 0
    %221 = vmatpush2.bf16.msra.mxu0 0
    %222 = vmatprep.subr.bf16.mxu0 0
    %223 = vmatpush2.bf16.msra.mxu0 0
    %224 = vmatprep.subr.bf16.mxu0 0
    %225 = vmatpush2.bf16.msra.mxu0 0
    %226 = vmatprep.subr.bf16.mxu0 0
    %227 = vmatpush2.bf16.msra.mxu0 0
    %228 = vmatprep.subr.bf16.mxu0 0
    %229 = vmatpush2.bf16.msra.mxu0 0
    %230 = vmatprep.mubr.bf16.mxu0 0
    %231 = vmatmul.mubr.bf16.gmra.mxu0 %v126
    %v232 = vpop.f32.mrf.mxu0
    %v233 = vadd.f32 %v148, %v232
    %v234 = vpop.f32.mrf.mxu0
    %v235 = vpop.f32.mrf.mxu0
    %v236 = vpop.f32.mrf.mxu0
    %237 = vdwg.mxu0
    %vm238 = vcmp.gt.f32.partialorder %v233, 0.0
    %v239 = vmul.f32 %v233, 0.01
    %v240 = vsel %vm238, %v233, %v239
    %v241 = vpack.c.bf16 %v240, %v240
    %v242 = vld [vmem:[%s5] sm:$0xf]
    %v243 = vld [vmem:[%s5 + $0x4] sm:$0xf]
    %v244 = vld [vmem:[%s5 + $0x8] sm:$0xf]
    %v245 = vld [vmem:[%s5 + $0xc] sm:$0xf]
    %v246 = vld [vmem:[%s5 + $0x10] sm:$0xf]
    %v247 = vld [vmem:[%s5 + $0x14] sm:$0xf]
    %v248 = vld [vmem:[%s5 + $0x18] sm:$0xf]
    %v249 = vld [vmem:[%s5 + $0x1c] sm:$0xf]
    %v250 = vld [vmem:[%s5 + $0x20] sm:$0xf]
    %v251 = vld [vmem:[%s5 + $0x24] sm:$0xf]
    %v252 = vld [vmem:[%s5 + $0x28] sm:$0xf]
    %v253 = vld [vmem:[%s5 + $0x2c] sm:$0xf]
    %v254 = vld [vmem:[%s5 + $0x30] sm:$0xf]
    %v255 = vld [vmem:[%s5 + $0x34] sm:$0xf]
    %v256 = vld [vmem:[%s5 + $0x38] sm:$0xf]
    %v257 = vld [vmem:[%s5 + $0x3c] sm:$0xf]
    %v258 = vld [vmem:[%s6] sm:$0x1]
    %v260 = vlaneseq
    %v261 = vshrl.u32 %v260, 7
    %v262 = vsub.s32 0, %v261
    %v263 = vrot.slane %v258, %v262
    %v281 = vunpack.c.l.b16 %v242
    %v282 = vunpack.c.l.b16 %v243
    %v283 = vunpack.c.l.b16 %v244
    %v284 = vunpack.c.l.b16 %v245
    %v285 = vunpack.c.l.b16 %v246
    %v286 = vunpack.c.l.b16 %v247
    %v287 = vunpack.c.l.b16 %v248
    %v288 = vunpack.c.l.b16 %v249
    %v289 = vunpack.c.l.b16 %v250
    %v290 = vunpack.c.l.b16 %v251
    %v291 = vunpack.c.l.b16 %v252
    %v292 = vunpack.c.l.b16 %v253
    %v293 = vunpack.c.l.b16 %v254
    %v294 = vunpack.c.l.b16 %v255
    %v295 = vunpack.c.l.b16 %v256
    %v296 = vunpack.c.l.b16 %v257
    %v297 = vpack.c.b16 %v282, %v281
    %v298 = vpack.c.b16 %v284, %v283
    %v299 = vpack.c.b16 %v286, %v285
    %v300 = vpack.c.b16 %v288, %v287
    %v301 = vpack.c.b16 %v290, %v289
    %v302 = vpack.c.b16 %v292, %v291
    %v303 = vpack.c.b16 %v294, %v293
    %v304 = vpack.c.b16 %v296, %v295
    %313 = vmatprep.subr.bf16.mxu0 0
    %314 = vmatpush1.bf16.msra.mxu0 %v304
    %315 = vmatprep.subr.bf16.mxu0 0
    %316 = vmatpush1.bf16.msra.mxu0 %v303
    %317 = vmatprep.subr.bf16.mxu0 0
    %318 = vmatpush1.bf16.msra.mxu0 %v302
    %319 = vmatprep.subr.bf16.mxu0 0
    %320 = vmatpush1.bf16.msra.mxu0 %v301
    %321 = vmatprep.subr.bf16.mxu0 0
    %322 = vmatpush1.bf16.msra.mxu0 %v300
    %323 = vmatprep.subr.bf16.mxu0 0
    %324 = vmatpush1.bf16.msra.mxu0 %v299
    %325 = vmatprep.subr.bf16.mxu0 0
    %326 = vmatpush1.bf16.msra.mxu0 %v298
    %327 = vmatprep.subr.bf16.mxu0 0
    %328 = vmatpush1.bf16.msra.mxu0 %v297
    %329 = vmatprep.subr.bf16.mxu0 0
    %330 = vmatpush2.bf16.msra.mxu0 0
    %331 = vmatprep.subr.bf16.mxu0 0
    %332 = vmatpush2.bf16.msra.mxu0 0
    %333 = vmatprep.subr.bf16.mxu0 0
    %334 = vmatpush2.bf16.msra.mxu0 0
    %335 = vmatprep.subr.bf16.mxu0 0
    %336 = vmatpush2.bf16.msra.mxu0 0
    %337 = vmatprep.subr.bf16.mxu0 0
    %338 = vmatpush2.bf16.msra.mxu0 0
    %339 = vmatprep.subr.bf16.mxu0 0
    %340 = vmatpush2.bf16.msra.mxu0 0
    %341 = vmatprep.subr.bf16.mxu0 0
    %342 = vmatpush2.bf16.msra.mxu0 0
    %343 = vmatprep.subr.bf16.mxu0 0
    %344 = vmatpush2.bf16.msra.mxu0 0
    %345 = vmatprep.mubr.bf16.mxu0 0
    %346 = vmatmul.mubr.bf16.gmra.mxu0 %v241
    %v347 = vpop.f32.mrf.mxu0
    %v348 = vadd.f32 %v263, %v347
    %v349 = vpop.f32.mrf.mxu0
    %v350 = vpop.f32.mrf.mxu0
    %v351 = vpop.f32.mrf.mxu0
    %352 = vdwg.mxu0
    %vm353 = vcmp.gt.f32.partialorder %v348, 0.0
    %v354 = vmul.f32 %v348, 0.01
    %v355 = vsel %vm353, %v348, %v354
    %vm356 = vcmask 80896
    %357 = vst.msk [vmem:[#allocation7] sm:$0xff] %vm356, %v355
    // Predicated region
    $region38: #{tpu_custom_call.1} parent=1 // pred_check
      _
    $region39: #{tpu_custom_call.1} parent=1 // pred_check_branch
      %359 = sbr.rel (0) target = $region41
    $region40: #{tpu_custom_call.1} parent=1 // pred_region
      %s361 = ssub.s32 128, 128
      %362 = vsyncadd [#allocation4], %s361
      %s364 = sshll.u32 [#allocation7], 4
      %s365 = int_to_ptr.vmem [resolvable:$true] %s364
      %367 = dma.vmem_to_hbm [thread:$0]  %s365, 128, %s7, [#allocation4]
    $region41: #{tpu_custom_call.1} parent=1 // pred_fallthru
      _
    // Predicated region
    $region42: #{tpu_custom_call.1} parent=1 // pred_check
      _
    $region43: #{tpu_custom_call.1} parent=1 // pred_check_branch
      %369 = sbr.rel (0) target = $region45
    $region44: #{tpu_custom_call.1} parent=1 // pred_region
      %370 = dma.done [#allocation4], 128
    $region45: #{tpu_custom_call.1} parent=1 // pred_fallthru
      _
    %371 = vsyncpa [#allocation3], 1
    %372 = vsyncpa [#allocation6], 1
    %373 = vsyncpa [#allocation4], 1

</llo_original>
